<compile_context>
chip_gen: v7x
topology: tpu7x:2x2x1
jax: 0.10.0
libtpu: 0.0.40
codegen_flags: <defaults>
</compile_context>

<pallas_src>
import functools

import jax
import jax.numpy as jnp
from jax.experimental import pallas as pl
from jax.experimental.pallas import tpu as pltpu

BN_EPS = 1e-5


def _round_up(n, m):
    return ((n + m - 1) // m) * m


def _vmem_capacity_bytes():
    """Best-effort VMEM capacity query; conservative (v7x) fallback."""
    try:
        return int(pltpu.get_tpu_info().vmem_capacity_bytes)
    except Exception:
        return 64 * 1024 * 1024


def _vmem_limit(footprint_bytes, vmem_cap):
    want = int(footprint_bytes * 1.5) + 2 * 1024 * 1024
    lo = 16 * 1024 * 1024
    hi = int(0.9 * vmem_cap)
    return max(lo, min(want, hi))


def _spec(shape, index_map, buffers=None):
    """BlockSpec with optional pipeline depth; degrades gracefully if the
    running JAX version does not support pipeline_mode / pl.Buffered."""
    if buffers is not None and hasattr(pl, "Buffered"):
        try:
            return pl.BlockSpec(shape, index_map,
                                pipeline_mode=pl.Buffered(buffers))
        except Exception:
            pass
    return pl.BlockSpec(shape, index_map)


# ---------------------------------------------------------------------------
# Kernel 1: BatchNorm2d (training-mode batch stats) over the squeezed input.
# Runs once (grid=(1,)); emits f32 `after_neck` and a bf16 copy for the MXU.
# ---------------------------------------------------------------------------
def _bn_kernel(x_ref, gb_ref, after_ref, after_bf16_ref, *, batch, batch_padded):
    # x_ref:          (Bp, Fp) f32   squeezed NCHW input (H=W=1), zero-padded
    # gb_ref:         (2, Fp)  f32   row 0 = gamma, row 1 = beta (padded w/ 0)
    # after_ref:      (Bp, Fp) f32   normalized features
    # after_bf16_ref: (Bp, Fp) bf16  same, cast for the classifier matmul
    x = x_ref[...]
    inv_b = 1.0 / batch
    # Biased (training-mode) batch statistics; spatial dims are 1 so the
    # reduction is over the batch axis only.  Padded rows are zero, so they do
    # not perturb the sum; they are masked out of the variance below.
    mean = jnp.sum(x, axis=0, keepdims=True) * inv_b              # (1, Fp)
    centered = x - mean
    if batch_padded != batch:
        row = jax.lax.broadcasted_iota(jnp.int32, (batch_padded, 1), 0)
        centered = jnp.where(row < batch, centered, 0.0)
    var = jnp.sum(centered * centered, axis=0, keepdims=True) * inv_b
    gamma = gb_ref[0:1, :]
    beta = gb_ref[1:2, :]
    # fold rsqrt(var + eps) and gamma into a single per-feature scale
    scale = jax.lax.rsqrt(var + BN_EPS) * gamma
    after = centered * scale + beta
    after_ref[...] = after
    after_bf16_ref[...] = after.astype(jnp.bfloat16)


# ---------------------------------------------------------------------------
# Kernel 2: bias-free Linear classifier, gridded ("parallel") over C tiles.
# ---------------------------------------------------------------------------
def _classifier_kernel(feat_ref, w_ref, score_ref):
    # feat_ref:  (Bp, Fp) bf16  normalized features (constant across tiles)
    # w_ref:     (TC, Fp) bf16  classifier weight row-block of (C, F)
    # score_ref: (Bp, TC) f32   logits tile
    # Transposed-RHS contraction (rhs dim 1) -> native MXU matmul, no wrapper
    # weight transpose and contiguous (TC, Fp) weight DMAs.
    score_ref[...] = jax.lax.dot_general(
        feat_ref[...], w_ref[...],
        dimension_numbers=(((1,), (1,)), ((), ())),
        preferred_element_type=jnp.float32,
    )


def bnneck_forward(x_nchw, bn_gamma, bn_beta, cls_w, *, force_tiled=False):
    """Pallas implementation of BNNeck.forward with return_f=True.

    x_nchw   : (B, input_dim, 1, 1) float32
    bn_gamma : (input_dim,) float32    BatchNorm2d weight
    bn_beta  : (input_dim,) float32    BatchNorm2d bias
    cls_w    : (class_num, input_dim) float32   Linear weight, no bias
    returns (after_neck (B, F), score (B, C), before_neck = x_nchw)
    """
    B, F, H, W = x_nchw.shape
    assert H == 1 and W == 1, "BNNeck squeezes dims 2,3 -> requires 1x1 spatial"
    C = cls_w.shape[0]
    assert cls_w.shape[1] == F

    Bp = _round_up(B, 16)          # bf16-friendly sublane multiple
    Fp = _round_up(F, 128)
    vmem_cap = _vmem_capacity_bytes()

    # ---- classifier tile selection ---------------------------------------
    Cp128 = _round_up(C, 128)
    single_shot_bytes = (Cp128 * Fp * 2          # whole bf16 weight resident
                         + Bp * Fp * 2           # bf16 activations
                         + 2 * Bp * Cp128 * 4    # score writeback buffers
                         + 2 * 1024 * 1024)      # headroom
    if (not force_tiled) and single_shot_bytes <= int(0.35 * vmem_cap):
        # Single-shot fast path: one DMA + one matmul, zero grid overhead.
        Cp, TC = Cp128, Cp128
    else:
        # Pad Cp UP to a multiple of 512 so the class tile is always 512 wide
        # (large weight DMAs, lane-dense score stores).
        Cp, TC = _round_up(C, 512), 512
    num_tiles = Cp // TC
    w_buf = 3 if num_tiles >= 3 else (2 if num_tiles == 2 else 1)

    # ---- input prep -------------------------------------------------------
    x2d = x_nchw.reshape(B, F).astype(jnp.float32)
    if (Bp, Fp) != (B, F):
        x2d = jnp.pad(x2d, ((0, Bp - B), (0, Fp - F)))
    gb = jnp.concatenate(
        [bn_gamma.astype(jnp.float32).reshape(1, F),
         bn_beta.astype(jnp.float32).reshape(1, F)], axis=0)      # (2, F)
    if Fp != F:
        gb = jnp.pad(gb, ((0, 0), (0, Fp - F)))
    # classifier weight kept in (C, F) layout (no transpose), cast to bf16
    wl = cls_w.astype(jnp.bfloat16)
    if (Cp, Fp) != (C, F):
        wl = jnp.pad(wl, ((0, Cp - C), (0, Fp - F)))

    # ---- call 1: BatchNorm ------------------------------------------------
    bn_footprint = (Bp * Fp * 4 + 2 * Fp * 4 + Bp * Fp * 4 + Bp * Fp * 2) * 2
    bn_cost = pl.CostEstimate(
        flops=8 * Bp * Fp,
        transcendentals=Fp,
        bytes_accessed=Bp * Fp * 4 + 2 * Fp * 4 + Bp * Fp * 4 + Bp * Fp * 2,
    )
    after_f32, after_bf16 = pl.pallas_call(
        functools.partial(_bn_kernel, batch=B, batch_padded=Bp),
        out_shape=(
            jax.ShapeDtypeStruct((Bp, Fp), jnp.float32),
            jax.ShapeDtypeStruct((Bp, Fp), jnp.bfloat16),
        ),
        grid=(1,),
        in_specs=[
            pl.BlockSpec((Bp, Fp), lambda i: (0, 0)),   # x
            pl.BlockSpec((2, Fp), lambda i: (0, 0)),    # gamma/beta (merged)
        ],
        out_specs=(
            pl.BlockSpec((Bp, Fp), lambda i: (0, 0)),   # after (f32)
            pl.BlockSpec((Bp, Fp), lambda i: (0, 0)),   # after (bf16)
        ),
        compiler_params=pltpu.CompilerParams(
            dimension_semantics=("arbitrary",),
            vmem_limit_bytes=_vmem_limit(bn_footprint, vmem_cap),
        ),
        cost_estimate=bn_cost,
    )(x2d, gb)

    # ---- call 2: classifier (weight-streaming, parallel over C tiles) -----
    cls_footprint = (Bp * Fp * 2 * 2                 # activations (worst case)
                     + TC * Fp * 2 * max(w_buf, 2)   # weight tiles in flight
                     + Bp * TC * 4 * 2)              # score writeback buffers
    cls_cost = pl.CostEstimate(
        flops=2 * Bp * Fp * Cp,
        transcendentals=0,
        bytes_accessed=Bp * Fp * 2 + Cp * Fp * 2 + Bp * Cp * 4,
    )
    score_p = pl.pallas_call(
        _classifier_kernel,
        out_shape=jax.ShapeDtypeStruct((Bp, Cp), jnp.float32),
        grid=(num_tiles,),
        in_specs=[
            _spec((Bp, Fp), lambda j: (0, 0), buffers=1),       # constant block
            _spec((TC, Fp), lambda j: (j, 0), buffers=w_buf),   # streamed weight
        ],
        out_specs=pl.BlockSpec((Bp, TC), lambda j: (0, j)),
        compiler_params=pltpu.CompilerParams(
            # no cross-tile state -> safe to shard across v7x TensorCores
            dimension_semantics=("parallel",),
            vmem_limit_bytes=_vmem_limit(cls_footprint, vmem_cap),
        ),
        cost_estimate=cls_cost,
    )(after_bf16, wl)

    after_neck = after_f32[:B, :F]
    score = score_p[:B, :C]
    # before_neck is literally the module input; no copy / no extra writeback.
    return after_neck, score, x_nchw


def _reference(x_nchw, bn_gamma, bn_beta, cls_w):
    B, F, _, _ = x_nchw.shape
    x = x_nchw.reshape(B, F).astype(jnp.float32)
    mean = x.mean(axis=0, keepdims=True)
    var = ((x - mean) ** 2).mean(axis=0, keepdims=True)
    after = (x - mean) / jnp.sqrt(var + BN_EPS) * bn_gamma + bn_beta
    score = after @ cls_w.T
    return after, score, x_nchw


if __name__ == "__main__":
    key = jax.random.PRNGKey(0)

    # ---- test 1: small shapes, single-shot classifier path ----------------
    B, INPUT_DIM, CLASS_NUM = 8, 32, 10
    k_x, k_g, k_b, k_cls, key = jax.random.split(key, 5)
    x = jax.random.normal(k_x, (B, INPUT_DIM, 1, 1), dtype=jnp.float32)
    bn_gamma = 1.0 + 0.1 * jax.random.normal(k_g, (INPUT_DIM,), dtype=jnp.float32)
    bn_beta = 0.05 * jax.random.normal(k_b, (INPUT_DIM,), dtype=jnp.float32)
    cls_w = 0.001 * jax.random.normal(k_cls, (CLASS_NUM, INPUT_DIM),
                                      dtype=jnp.float32)

    after_neck, score, before_neck = jax.block_until_ready(
        bnneck_forward(x, bn_gamma, bn_beta, cls_w))
    ref_after, ref_score, ref_before = _reference(x, bn_gamma, bn_beta, cls_w)

    assert after_neck.shape == (B, INPUT_DIM)
    assert score.shape == (B, CLASS_NUM)
    assert before_neck.shape == x.shape
    assert jnp.array_equal(before_neck, ref_before)
    assert jnp.allclose(after_neck, ref_after, atol=1e-5, rtol=1e-4)
    # classifier ran with bf16 operands (f32 accumulation) -> bf16-level tol
    assert jnp.allclose(score, ref_score, atol=3e-4, rtol=2e-2)

    # ---- test 2: force the tiled / parallel-grid classifier path ----------
    B2, F2, C2 = 4, 64, 600
    k_x, k_g, k_b, k_cls, key = jax.random.split(key, 5)
    x2 = jax.random.normal(k_x, (B2, F2, 1, 1), dtype=jnp.float32)
    g2 = 1.0 + 0.1 * jax.random.normal(k_g, (F2,), dtype=jnp.float32)
    b2 = 0.05 * jax.random.normal(k_b, (F2,), dtype=jnp.float32)
    w2 = 0.001 * jax.random.normal(k_cls, (C2, F2), dtype=jnp.float32)

    after2, score2, before2 = jax.block_until_ready(
        bnneck_forward(x2, g2, b2, w2, force_tiled=True))
    ra2, rs2, rb2 = _reference(x2, g2, b2, w2)

    assert after2.shape == (B2, F2)
    assert score2.shape == (B2, C2)
    assert jnp.array_equal(before2, rb2)
    assert jnp.allclose(after2, ra2, atol=1e-5, rtol=1e-4)
    assert jnp.allclose(score2, rs2, atol=3e-4, rtol=2e-2)

    print("KERNEL_OK")
</pallas_src>

<mosaic_0001>
module attributes {stable_mosaic.version = 11 : i64} {
  func.func @_bn_kernel(%arg0: i32, %arg1: memref<16x128xf32, #tpu.memory_space<vmem>>, %arg2: memref<2x128xf32, #tpu.memory_space<vmem>>, %arg3: memref<16x128xf32, #tpu.memory_space<vmem>>, %arg4: memref<16x128xbf16, #tpu.memory_space<vmem>>) attributes {dimension_semantics = [#tpu.dimension_semantics<arbitrary>], iteration_bounds = array<i64: 1>, scalar_prefetch = 0 : i64, scratch_operands = 0 : i64, tpu.core_type = #tpu.core_type<tc>, window_params = [{pipeline_mode = #tpu.pipeline_mode<synchronous>, transform_indices = @transform_0, window_bounds = array<i64: 16, 128>}, {pipeline_mode = #tpu.pipeline_mode<synchronous>, transform_indices = @transform_1, window_bounds = array<i64: 2, 128>}, {pipeline_mode = #tpu.pipeline_mode<synchronous>, transform_indices = @transform_2, window_bounds = array<i64: 16, 128>}, {pipeline_mode = #tpu.pipeline_mode<synchronous>, transform_indices = @transform_3, window_bounds = array<i64: 16, 128>}]} {
    %c0 = arith.constant 0 : index
    %c0_0 = arith.constant 0 : index
    %0 = vector.load %arg1[%c0, %c0_0] : memref<16x128xf32, #tpu.memory_space<vmem>>, vector<16x128xf32>
    %cst = arith.constant dense<0.000000e+00> : vector<128xf32>
    %1 = vector.multi_reduction <add>, %0, %cst [0] : vector<16x128xf32> to vector<128xf32>
    %2 = vector.shape_cast %1 : vector<128xf32> to vector<1x128xf32>
    %cst_1 = arith.constant 1.250000e-01 : f32
    %3 = vector.broadcast %cst_1 : f32 to vector<1x128xf32>
    %4 = arith.mulf %2, %3 : vector<1x128xf32>
    %5 = vector.broadcast %4 : vector<1x128xf32> to vector<16x128xf32>
    %6 = arith.subf %0, %5 : vector<16x128xf32>
    %7 = tpu.iota {dimensions = array<i32: 0>} : vector<16x1xi32>
    %c8_i32 = arith.constant 8 : i32
    %8 = vector.broadcast %c8_i32 : i32 to vector<16x1xi32>
    %9 = arith.cmpi slt, %7, %8 : vector<16x1xi32>
    %cst_2 = arith.constant 0.000000e+00 : f32
    %10 = vector.shape_cast %9 : vector<16x1xi1> to vector<16x1xi1>
    %11 = vector.broadcast %10 : vector<16x1xi1> to vector<16x128xi1>
    %12 = vector.broadcast %cst_2 : f32 to vector<16x128xf32>
    %13 = arith.select %11, %6, %12 : vector<16x128xi1>, vector<16x128xf32>
    %14 = arith.mulf %13, %13 : vector<16x128xf32>
    %cst_3 = arith.constant dense<0.000000e+00> : vector<128xf32>
    %15 = vector.multi_reduction <add>, %14, %cst_3 [0] : vector<16x128xf32> to vector<128xf32>
    %16 = vector.shape_cast %15 : vector<128xf32> to vector<1x128xf32>
    %cst_4 = arith.constant 1.250000e-01 : f32
    %17 = vector.broadcast %cst_4 : f32 to vector<1x128xf32>
    %18 = arith.mulf %16, %17 : vector<1x128xf32>
    %c0_5 = arith.constant 0 : index
    %c0_6 = arith.constant 0 : index
    %19 = vector.load %arg2[%c0_5, %c0_6] : memref<2x128xf32, #tpu.memory_space<vmem>>, vector<1x128xf32>
    %c1 = arith.constant 1 : index
    %c0_7 = arith.constant 0 : index
    %20 = vector.load %arg2[%c1, %c0_7] : memref<2x128xf32, #tpu.memory_space<vmem>>, vector<1x128xf32>
    %cst_8 = arith.constant 9.99999974E-6 : f32
    %21 = vector.broadcast %cst_8 : f32 to vector<1x128xf32>
    %22 = arith.addf %18, %21 : vector<1x128xf32>
    %23 = math.rsqrt %22 : vector<1x128xf32>
    %24 = arith.mulf %23, %19 : vector<1x128xf32>
    %25 = vector.broadcast %24 : vector<1x128xf32> to vector<16x128xf32>
    %26 = arith.mulf %13, %25 : vector<16x128xf32>
    %27 = vector.broadcast %20 : vector<1x128xf32> to vector<16x128xf32>
    %28 = arith.addf %26, %27 : vector<16x128xf32>
    %c0_9 = arith.constant 0 : index
    %c0_10 = arith.constant 0 : index
    %29 = vector.load %arg3[%c0_9, %c0_10] : memref<16x128xf32, #tpu.memory_space<vmem>>, vector<16x128xf32>
    tpu.vector_store %arg3[%c0_9, %c0_10], %28 {strides = array<i32>} : memref<16x128xf32, #tpu.memory_space<vmem>>, vector<16x128xf32>,
    %30 = arith.truncf %28 : vector<16x128xf32> to vector<16x128xbf16>
    %c0_11 = arith.constant 0 : index
    %c0_12 = arith.constant 0 : index
    %31 = vector.load %arg4[%c0_11, %c0_12] : memref<16x128xbf16, #tpu.memory_space<vmem>>, vector<16x128xbf16>
    tpu.vector_store %arg4[%c0_11, %c0_12], %30 {strides = array<i32>} : memref<16x128xbf16, #tpu.memory_space<vmem>>, vector<16x128xbf16>,
    return
  }
  func.func @transform_0(%arg0: i32) -> (i32, i32) {
    %c0_i32 = arith.constant 0 : i32
    %c0_i32_0 = arith.constant 0 : i32
    %c0_i32_1 = arith.constant 0 : i32
    return %c0_i32, %c0_i32_0 : i32, i32
  }
  func.func @transform_1(%arg0: i32) -> (i32, i32) {
    %c0_i32 = arith.constant 0 : i32
    %c0_i32_0 = arith.constant 0 : i32
    %c0_i32_1 = arith.constant 0 : i32
    return %c0_i32, %c0_i32_0 : i32, i32
  }
  func.func @transform_2(%arg0: i32) -> (i32, i32) {
    %c0_i32 = arith.constant 0 : i32
    %c0_i32_0 = arith.constant 0 : i32
    %c0_i32_1 = arith.constant 0 : i32
    return %c0_i32, %c0_i32_0 : i32, i32
  }
  func.func @transform_3(%arg0: i32) -> (i32, i32) {
    %c0_i32 = arith.constant 0 : i32
    %c0_i32_0 = arith.constant 0 : i32
    %c0_i32_1 = arith.constant 0 : i32
    return %c0_i32, %c0_i32_0 : i32, i32
  }
}

</mosaic_0001>

<llo_original>
// kernel: tpu_custom_call.1
$region0: #{tpu_custom_call.1}
  #allocation0 [shape = 'u32[]', space=smem, size = 0x4, offset = 0x4, fixed_abs, tag = 'smem constant byte address 0x4 - core index']
  #allocation1 [shape = 'u32[144,128]{1,0:T(1,128)}', space=vmem, size = 0x12000, scoped, tag = 'internal scratch']
  %s0 = inlined_call_operand.hbm [shape: f32[16,128], index: 0, kind: input, shape index: {}]
  %s1 = inlined_call_operand.vmem [shape: f32[2,128], index: 1, kind: input, shape index: {}]
  %s2 = inlined_call_operand.hbm [shape: f32[16,128], index: 2, kind: output, shape index: {0}]
  %s3 = inlined_call_operand.hbm [shape: bf16[16,128], index: 3, kind: output, shape index: {1}]
  %4 = xla_tuple %s2, %s3
  %s5 = sld [smem:[#allocation0]]
  $region30: #{tpu_custom_call.1} parent=0
    _
  %s7 = ssub.s32 1, %s5
  %s8 = scalar_select 0, %s7, %s5
  $region1: #{tpu_custom_call.1} parent=0
    #allocation2 [shape = 'u8[8192]{0}', space=vmem, size = 0x2000, scoped, tag = 'input window, operand 0, single buffered']
    #allocation3 [shape = 's32[1]{0}', space=sflag, size = 0x4, scoped, tag = 'scoped memory for tpu_custom_call.1']
    #allocation4 [shape = 's32[1]{0}', space=sflag, size = 0x4, scoped, tag = 'scoped memory for tpu_custom_call.1']
    #allocation5 [shape = 'u8[8192]{0}', space=vmem, size = 0x2000, scoped, tag = 'output window, operand 0, single buffered']
    #allocation6 [shape = 'u8[4096]{0}', space=vmem, size = 0x1000, scoped, tag = 'output window, operand 1, single buffered']
    #allocation7 [shape = 's32[1]{0}', space=sflag, size = 0x4, scoped, tag = 'scoped memory for tpu_custom_call.1']
    %9 = vsyncpa [#allocation3], 0
    %10 = vsyncpa [#allocation4], 0
    %11 = vsyncpa [#allocation7], 0
    // Predicated region
    $region2: #{tpu_custom_call.1} parent=1 // pred_check
      _
    $region3: #{tpu_custom_call.1} parent=1 // pred_check_branch
      %13 = sbr.rel (0) target = $region5
    $region4: #{tpu_custom_call.1} parent=1 // pred_region
      %s15 = ssub.s32 256, 256
      %16 = vsyncadd [#allocation3], %s15
      %s17 = sshll.u32 [#allocation2], 4
      %s18 = int_to_ptr.vmem [resolvable:$true] %s17
      %23 = dma.hbm_to_vmem [thread:$0]  %s0, 256, %s18, [#allocation3], 128, 128, 8
    $region5: #{tpu_custom_call.1} parent=1 // pred_fallthru
      _
    // Predicated region
    $region6: #{tpu_custom_call.1} parent=1 // pred_check
      _
    $region7: #{tpu_custom_call.1} parent=1 // pred_check_branch
      %25 = sbr.rel (0) target = $region9
    $region8: #{tpu_custom_call.1} parent=1 // pred_region
      _
    $region9: #{tpu_custom_call.1} parent=1 // pred_fallthru
      _
    // Predicated region
    $region10: #{tpu_custom_call.1} parent=1 // pred_check
      _
    $region11: #{tpu_custom_call.1} parent=1 // pred_check_branch
      %27 = sbr.rel (0) target = $region13
    $region12: #{tpu_custom_call.1} parent=1 // pred_region
      %28 = dma.done [#allocation3], 256
    $region13: #{tpu_custom_call.1} parent=1 // pred_fallthru
      _
    %v29 = vld [vmem:[#allocation2] sm:$0xff]
    %v30 = vld [vmem:[#allocation2 + $0x8] sm:$0xff]
    %v31 = vadd.f32 %v29, %v30
    %v32 = vrot.slane %v31, 4
    %v33 = vadd.f32 %v31, %v32
    %v34 = vrot.slane %v33, 2
    %v35 = vadd.f32 %v33, %v34
    %v36 = vrot.slane %v35, 1
    %v37 = vadd.f32 %v35, %v36
    %v38 = vmul.f32 %v37, 0.125
    %v39 = vsub.f32 %v29, %v38
    %v40 = vsub.f32 %v30, %v38
    %v41 = vlaneseq
    %v42 = vshrl.u32 %v41, 7
    %v43 = vadd.s32 %v42, 8
    %vm44 = vcmp.lt.s32.totalorder %v42, 8
    %vm45 = vcmp.lt.s32.totalorder %v43, 8
    %v46 = vsel %vm44, 1, 0
    %v47 = vsel %vm45, 1, 0
    %vm48 = vcmp.eq.s32.totalorder %v46, 1
    %vm49 = vcmp.eq.s32.totalorder %v47, 1
    %v50 = vsel %vm48, %v39, 0.0
    %v51 = vsel %vm49, %v40, 0.0
    %v52 = vmul.f32 %v50, %v50
    %v53 = vmul.f32 %v51, %v51
    %v54 = vadd.f32 %v52, %v53
    %v55 = vrot.slane %v54, 4
    %v56 = vadd.f32 %v54, %v55
    %v57 = vrot.slane %v56, 2
    %v58 = vadd.f32 %v56, %v57
    %v59 = vrot.slane %v58, 1
    %v60 = vadd.f32 %v58, %v59
    %v61 = vmul.f32 %v60, 0.125
    %v62 = vld [vmem:[%s1] sm:$0x1]
    %v63 = vld [vmem:[%s1 + $0x1] sm:$0x1]
    %v64 = vadd.f32 %v61, 1e-05
    %v65 = vrsqrt.pop %v64
    %v66 = vmul.f32 %v65, %v62
    %v67 = vlaneseq
    %v68 = vshrl.u32 %v67, 7
    %v69 = vsub.s32 0, %v68
    %v70 = vrot.slane %v66, %v69
    %v71 = vmul.f32 %v50, %v70
    %v72 = vmul.f32 %v51, %v70
    %v73 = vlaneseq
    %v74 = vshrl.u32 %v73, 7
    %v75 = vsub.s32 0, %v74
    %v76 = vrot.slane %v63, %v75
    %v77 = vadd.f32 %v71, %v76
    %v78 = vadd.f32 %v72, %v76
    %79 = vst [vmem:[#allocation5] sm:$0xff] %v77
    %80 = vst [vmem:[#allocation5 + $0x8] sm:$0xff] %v78
    %v81 = vpack.c.bf16 %v78, %v77
    %v83 = vunpack.c.l.b16 %v81
    %v84 = vunpack.c.h.b16 %v81
    %v85 = vpack.c.b16 %v83, %v83
    %v86 = vpack.c.b16 %v84, %v84
    %89 = vst [vmem:[#allocation6] sm:$0xf] %v85
    %90 = vst [vmem:[#allocation6 + $0x4] sm:$0xf] %v86
    // Predicated region
    $region14: #{tpu_custom_call.1} parent=1 // pred_check
      _
    $region15: #{tpu_custom_call.1} parent=1 // pred_check_branch
      %92 = sbr.rel (0) target = $region17
    $region16: #{tpu_custom_call.1} parent=1 // pred_region
      %s94 = ssub.s32 256, 256
      %95 = vsyncadd [#allocation4], %s94
      %s96 = sshll.u32 [#allocation5], 4
      %s97 = int_to_ptr.vmem [resolvable:$true] %s96
      %102 = dma.vmem_to_hbm [thread:$0]  %s97, 256, %s2, [#allocation4], 128, 128, 8
    $region17: #{tpu_custom_call.1} parent=1 // pred_fallthru
      _
    // Predicated region
    $region18: #{tpu_custom_call.1} parent=1 // pred_check
      _
    $region19: #{tpu_custom_call.1} parent=1 // pred_check_branch
      %104 = sbr.rel (0) target = $region21
    $region20: #{tpu_custom_call.1} parent=1 // pred_region
      %s106 = ssub.s32 128, 128
      %107 = vsyncadd [#allocation7], %s106
      %s108 = sshll.u32 [#allocation6], 4
      %s109 = int_to_ptr.vmem [resolvable:$true] %s108
      %114 = dma.vmem_to_hbm [thread:$0]  %s109, 128, %s3, [#allocation7], 64, 64, 4
    $region21: #{tpu_custom_call.1} parent=1 // pred_fallthru
      _
    // Predicated region
    $region22: #{tpu_custom_call.1} parent=1 // pred_check
      _
    $region23: #{tpu_custom_call.1} parent=1 // pred_check_branch
      %116 = sbr.rel (0) target = $region25
    $region24: #{tpu_custom_call.1} parent=1 // pred_region
      %117 = dma.done [#allocation4], 256
    $region25: #{tpu_custom_call.1} parent=1 // pred_fallthru
      _
    // Predicated region
    $region26: #{tpu_custom_call.1} parent=1 // pred_check
      _
    $region27: #{tpu_custom_call.1} parent=1 // pred_check_branch
      %119 = sbr.rel (0) target = $region29
    $region28: #{tpu_custom_call.1} parent=1 // pred_region
      %120 = dma.done [#allocation7], 128
    $region29: #{tpu_custom_call.1} parent=1 // pred_fallthru
      _
    %121 = vsyncpa [#allocation3], 1
    %122 = vsyncpa [#allocation4], 1
    %123 = vsyncpa [#allocation7], 1

</llo_original>
